<compile_context>
chip_gen: v5e
topology: v5e:2x2
jax: 0.10.0
libtpu: 0.0.40
codegen_flags: <defaults>
</compile_context>

<pallas_src>
import jax
import jax.numpy as jnp
from jax.experimental import pallas as pl
from jax.experimental.pallas import tpu as pltpu

EPS = 1e-7        # Hyperboloid.eps[float32]
MIN_NORM = 1e-15  # Hyperboloid.min_norm


def hypact_kernel(c_in_ref, c_out_ref, x_ref, o_ref):
    x = x_ref[...].astype(jnp.float32)
    tm, D = x.shape

    col = jax.lax.broadcasted_iota(jnp.int32, (tm, D), 1)
    is_time = col == 0                        # column 0 = time-like hyperboloid coord

    c_in = c_in_ref[0]
    c_out = c_out_ref[0]
    K_in = 1.0 / c_in
    sqrtK_in = jnp.sqrt(K_in)
    inv_sqrtK_in = 1.0 / sqrtK_in
    K_out = 1.0 / c_out
    sqrtK_out = jnp.sqrt(K_out)
    inv_sqrtK_out = 1.0 / sqrtK_out

    # ---------------- logmap0 (curvature c_in) ----------------
    x0 = x[:, 0:1]                                        # static lane slice, (tm, 1)
    y = jnp.where(is_time, 0.0, x)                        # spatial coords, time zeroed
    y_norm = jnp.maximum(jnp.sqrt(jnp.sum(y * y, axis=-1, keepdims=True)), MIN_NORM)
    theta = jnp.maximum(x0 * inv_sqrtK_in, 1.0 + EPS)
    arcosh = jnp.log(theta + jnp.sqrt(theta * theta - 1.0))
    log_scale = (sqrtK_in * arcosh) * pl.reciprocal(y_norm, approx=False)   # (tm, 1)

    # ---------------- relu + proj_tan0 ----------------
    # time column of y is exactly 0 and log_scale >= 0, so the time coord stays 0
    # through the relu -> proj_tan0 is a no-op here.
    xt = jnp.maximum(y * log_scale, 0.0)

    # ---------------- expmap0 (curvature c_out) ----------------
    u_norm = jnp.maximum(jnp.sqrt(jnp.sum(xt * xt, axis=-1, keepdims=True)), MIN_NORM)
    th = u_norm * inv_sqrtK_out
    e = jnp.exp(th)
    sinh = 0.5 * (e - pl.reciprocal(e, approx=False))     # cosh not needed: proj below
    exp_scale = (sqrtK_out * sinh) * pl.reciprocal(u_norm, approx=False)    # (tm, 1)
    sp = xt * exp_scale                                   # spatial part of the output

    # ---------------- proj (curvature c_out) ----------------
    # expmap0 applies proj internally and forward() applies it again; both simply
    # overwrite the time coordinate from the same spatial values, so one proj is
    # bit-identical to the reference's double proj.
    sp_sq = jnp.sum(sp * sp, axis=-1, keepdims=True)      # time column contributes 0
    t = jnp.sqrt(jnp.maximum(K_out + sp_sq, EPS))
    o_ref[...] = jnp.where(is_time, t, sp).astype(o_ref.dtype)


def _choose_tile(N, D):
    """Pick a row-tile: big enough to amortize the ~0.35us/step pipeline overhead,
    small enough that double-buffered input+output (~4 * tm * d_lanes * 4 B) fits the
    smallest scoped-VMEM default (16 MiB on v5e, 32 MiB on v6e/v7x) with headroom."""
    d_lanes = ((D + 127) // 128) * 128            # VMEM pads the lane dim to 128
    per_block_budget = 2 * 1024 * 1024            # 2 MiB/block -> ~8 MiB total pipelined
    tm = (per_block_budget // (d_lanes * 4)) // 8 * 8
    tm = int(max(8, min(4096, tm)))
    n8 = ((N + 7) // 8) * 8
    if tm >= n8:
        tm = n8
        if tm >= 1024:
            # keep the grid >= 2 so the "parallel" axis can shard across the
            # two v7x TensorCores instead of idling one.
            tm = ((tm // 2) + 7) // 8 * 8
    return tm


def hypact(x, c_in, c_out, *, tm=None):
    N, D = x.shape
    if tm is None:
        tm = _choose_tile(N, D)
    else:
        tm = max(8, ((int(tm) + 7) // 8) * 8)

    grid_n = pl.cdiv(N, tm)
    n_pad = grid_n * tm
    # Zero rows are numerically safe through the whole pipeline (no NaN/Inf) and are
    # sliced away afterwards.
    x_in = x if n_pad == N else jnp.pad(x, ((0, n_pad - N), (0, 0)))

    c_in_arr = jnp.asarray([c_in], jnp.float32)
    c_out_arr = jnp.asarray([c_out], jnp.float32)

    out = pl.pallas_call(
        hypact_kernel,
        out_shape=jax.ShapeDtypeStruct((n_pad, D), x.dtype),
        grid=(grid_n,),
        in_specs=[
            pl.BlockSpec(memory_space=pltpu.SMEM),            # c_in  scalar
            pl.BlockSpec(memory_space=pltpu.SMEM),            # c_out scalar
            pl.BlockSpec((tm, D), lambda i: (i, 0)),          # x row tile
        ],
        out_specs=pl.BlockSpec((tm, D), lambda i: (i, 0)),
        compiler_params=pltpu.CompilerParams(
            dimension_semantics=("parallel",),
            vmem_limit_bytes=32 * 1024 * 1024,
        ),
    )(c_in_arr, c_out_arr, x_in)
    return out if n_pad == N else out[:N]


# ---------------- pure-JAX reference (mirrors the torch Hyperboloid code) ----------------
def _ref_hypact(x, c_in, c_out):
    def logmap0(x, c):
        K = 1.0 / c
        sqrtK = K ** 0.5
        y = x[:, 1:]
        y_norm = jnp.maximum(jnp.linalg.norm(y, axis=1, keepdims=True), MIN_NORM)
        theta = jnp.maximum(x[:, 0:1] / sqrtK, 1.0 + EPS)
        arcosh = jnp.log(theta + jnp.sqrt(theta * theta - 1.0))
        sp = sqrtK * arcosh * y / y_norm
        return jnp.concatenate([jnp.zeros_like(x[:, 0:1]), sp], axis=1)

    def proj_tan0(u, c):
        return jnp.concatenate([jnp.zeros_like(u[:, 0:1]), u[:, 1:]], axis=1)

    def proj(x, c):
        K = 1.0 / c
        y = x[:, 1:]
        y_sq = jnp.sum(y * y, axis=1, keepdims=True)
        t = jnp.sqrt(jnp.maximum(K + y_sq, EPS))
        return jnp.concatenate([t, y], axis=1)

    def expmap0(u, c):
        K = 1.0 / c
        sqrtK = K ** 0.5
        usp = u[:, 1:]
        u_norm = jnp.maximum(jnp.linalg.norm(usp, axis=1, keepdims=True), MIN_NORM)
        theta = u_norm / sqrtK
        t = sqrtK * jnp.cosh(theta)
        sp = sqrtK * jnp.sinh(theta) * usp / u_norm
        return proj(jnp.concatenate([t, sp], axis=1), c)

    xt = jax.nn.relu(logmap0(x, c_in))
    xt = proj_tan0(xt, c_out)
    return proj(expmap0(xt, c_out), c_out)


if __name__ == "__main__":
    c_in, c_out = 1.0, 0.5

    def make_points(key, N, D, c):
        # points on the hyperboloid of curvature c: -x0^2 + ||y||^2 = -1/c
        y = 0.5 * jax.random.normal(key, (N, D - 1), dtype=jnp.float32)
        x0 = jnp.sqrt(1.0 / c + jnp.sum(y * y, axis=1, keepdims=True))
        return jnp.concatenate([x0, y], axis=1)

    # 16 nodes, 8-dim ambient coords (1 time + 7 spatial)
    N, D = 16, 8
    x = make_points(jax.random.PRNGKey(0), N, D, c_in)
    out = hypact(x, c_in, c_out)
    jax.block_until_ready(out)
    ref = _ref_hypact(x, c_in, c_out)
    assert out.shape == (N, D)
    assert jnp.allclose(out, ref, atol=1e-5, rtol=1e-5), (
        f"max abs diff {jnp.max(jnp.abs(out - ref))}")

    # ragged row count: exercises the cdiv grid + zero-padding tail path
    N2 = 37
    x2 = make_points(jax.random.PRNGKey(1), N2, D, c_in)
    out2 = hypact(x2, c_in, c_out)
    jax.block_until_ready(out2)
    ref2 = _ref_hypact(x2, c_in, c_out)
    assert out2.shape == (N2, D)
    assert jnp.allclose(out2, ref2, atol=1e-5, rtol=1e-5), (
        f"max abs diff {jnp.max(jnp.abs(out2 - ref2))}")

    print("KERNEL_OK")
</pallas_src>

<mosaic_0001>
module attributes {stable_mosaic.version = 11 : i64} {
  func.func @hypact_kernel(%arg0: i32, %arg1: memref<1xf32, #tpu.memory_space<smem>>, %arg2: memref<1xf32, #tpu.memory_space<smem>>, %arg3: memref<16x8xf32, #tpu.memory_space<vmem>>, %arg4: memref<16x8xf32, #tpu.memory_space<vmem>>) attributes {dimension_semantics = [#tpu.dimension_semantics<parallel>], iteration_bounds = array<i64: 1>, scalar_prefetch = 0 : i64, scratch_operands = 0 : i64, tpu.core_type = #tpu.core_type<tc>, window_params = [{transform_indices = @transform_0, window_bounds = array<i64: 1>}, {transform_indices = @transform_1, window_bounds = array<i64: 1>}, {transform_indices = @transform_2, window_bounds = array<i64: 16, 8>}, {transform_indices = @transform_3, window_bounds = array<i64: 16, 8>}]} {
    %c0 = arith.constant 0 : index
    %c0_0 = arith.constant 0 : index
    %0 = vector.load %arg3[%c0, %c0_0] : memref<16x8xf32, #tpu.memory_space<vmem>>, vector<16x8xf32>
    %1 = tpu.iota {dimensions = array<i32: 1>} : vector<16x8xi32>
    %c0_i32 = arith.constant 0 : i32
    %2 = vector.broadcast %c0_i32 : i32 to vector<16x8xi32>
    %3 = arith.cmpi eq, %1, %2 : vector<16x8xi32>
    %c0_1 = arith.constant 0 : index
    %4 = memref.load %arg1[%c0_1] : memref<1xf32, #tpu.memory_space<smem>>
    %c0_2 = arith.constant 0 : index
    %5 = memref.load %arg2[%c0_2] : memref<1xf32, #tpu.memory_space<smem>>
    %cst = arith.constant 1.000000e+00 : f32
    %6 = arith.divf %cst, %4 : f32
    %7 = math.sqrt %6 : f32
    %cst_3 = arith.constant 1.000000e+00 : f32
    %8 = arith.divf %cst_3, %7 : f32
    %cst_4 = arith.constant 1.000000e+00 : f32
    %9 = arith.divf %cst_4, %5 : f32
    %10 = math.sqrt %9 : f32
    %cst_5 = arith.constant 1.000000e+00 : f32
    %11 = arith.divf %cst_5, %10 : f32
    %12 = vector.extract_strided_slice %0 {offsets = [0, 0], sizes = [16, 1], strides = [1, 1]} : vector<16x8xf32> to vector<16x1xf32>
    %cst_6 = arith.constant 0.000000e+00 : f32
    %13 = vector.broadcast %cst_6 : f32 to vector<16x8xf32>
    %14 = arith.select %3, %13, %0 : vector<16x8xi1>, vector<16x8xf32>
    %15 = arith.mulf %14, %14 : vector<16x8xf32>
    %cst_7 = arith.constant dense<0.000000e+00> : vector<16xf32>
    %16 = vector.multi_reduction <add>, %15, %cst_7 [1] : vector<16x8xf32> to vector<16xf32>
    %17 = vector.shape_cast %16 : vector<16xf32> to vector<16x1xf32>
    %18 = math.sqrt %17 : vector<16x1xf32>
    %cst_8 = arith.constant 1.000000e-15 : f32
    %19 = vector.broadcast %cst_8 : f32 to vector<16x1xf32>
    %20 = arith.maximumf %18, %19 : vector<16x1xf32>
    %21 = vector.broadcast %8 : f32 to vector<16x1xf32>
    %22 = arith.mulf %12, %21 : vector<16x1xf32>
    %cst_9 = arith.constant 1.00000012 : f32
    %23 = vector.broadcast %cst_9 : f32 to vector<16x1xf32>
    %24 = arith.maximumf %22, %23 : vector<16x1xf32>
    %25 = arith.mulf %24, %24 : vector<16x1xf32>
    %cst_10 = arith.constant 1.000000e+00 : f32
    %26 = vector.broadcast %cst_10 : f32 to vector<16x1xf32>
    %27 = arith.subf %25, %26 : vector<16x1xf32>
    %28 = math.sqrt %27 : vector<16x1xf32>
    %29 = arith.addf %24, %28 : vector<16x1xf32>
    %30 = math.log %29 : vector<16x1xf32>
    %31 = vector.broadcast %7 : f32 to vector<16x1xf32>
    %32 = arith.mulf %31, %30 : vector<16x1xf32>
    %33 = tpu.reciprocal %20 : vector<16x1xf32> -> vector<16x1xf32>
    %34 = arith.mulf %32, %33 : vector<16x1xf32>
    %35 = vector.broadcast %34 : vector<16x1xf32> to vector<16x8xf32>
    %36 = arith.mulf %14, %35 : vector<16x8xf32>
    %cst_11 = arith.constant 0.000000e+00 : f32
    %37 = vector.broadcast %cst_11 : f32 to vector<16x8xf32>
    %38 = arith.maximumf %36, %37 : vector<16x8xf32>
    %39 = arith.mulf %38, %38 : vector<16x8xf32>
    %cst_12 = arith.constant dense<0.000000e+00> : vector<16xf32>
    %40 = vector.multi_reduction <add>, %39, %cst_12 [1] : vector<16x8xf32> to vector<16xf32>
    %41 = vector.shape_cast %40 : vector<16xf32> to vector<16x1xf32>
    %42 = math.sqrt %41 : vector<16x1xf32>
    %cst_13 = arith.constant 1.000000e-15 : f32
    %43 = vector.broadcast %cst_13 : f32 to vector<16x1xf32>
    %44 = arith.maximumf %42, %43 : vector<16x1xf32>
    %45 = vector.broadcast %11 : f32 to vector<16x1xf32>
    %46 = arith.mulf %44, %45 : vector<16x1xf32>
    %47 = math.exp %46 : vector<16x1xf32>
    %48 = tpu.reciprocal %47 : vector<16x1xf32> -> vector<16x1xf32>
    %49 = arith.subf %47, %48 : vector<16x1xf32>
    %cst_14 = arith.constant 5.000000e-01 : f32
    %50 = vector.broadcast %cst_14 : f32 to vector<16x1xf32>
    %51 = arith.mulf %50, %49 : vector<16x1xf32>
    %52 = vector.broadcast %10 : f32 to vector<16x1xf32>
    %53 = arith.mulf %52, %51 : vector<16x1xf32>
    %54 = tpu.reciprocal %44 : vector<16x1xf32> -> vector<16x1xf32>
    %55 = arith.mulf %53, %54 : vector<16x1xf32>
    %56 = vector.broadcast %55 : vector<16x1xf32> to vector<16x8xf32>
    %57 = arith.mulf %38, %56 : vector<16x8xf32>
    %58 = arith.mulf %57, %57 : vector<16x8xf32>
    %cst_15 = arith.constant dense<0.000000e+00> : vector<16xf32>
    %59 = vector.multi_reduction <add>, %58, %cst_15 [1] : vector<16x8xf32> to vector<16xf32>
    %60 = vector.shape_cast %59 : vector<16xf32> to vector<16x1xf32>
    %61 = vector.broadcast %9 : f32 to vector<16x1xf32>
    %62 = arith.addf %61, %60 : vector<16x1xf32>
    %cst_16 = arith.constant 1.000000e-07 : f32
    %63 = vector.broadcast %cst_16 : f32 to vector<16x1xf32>
    %64 = arith.maximumf %62, %63 : vector<16x1xf32>
    %65 = math.sqrt %64 : vector<16x1xf32>
    %66 = vector.shape_cast %65 : vector<16x1xf32> to vector<16x1xf32>
    %67 = vector.broadcast %66 : vector<16x1xf32> to vector<16x8xf32>
    %68 = arith.select %3, %67, %57 : vector<16x8xi1>, vector<16x8xf32>
    %c0_17 = arith.constant 0 : index
    %c0_18 = arith.constant 0 : index
    %69 = vector.load %arg4[%c0_17, %c0_18] : memref<16x8xf32, #tpu.memory_space<vmem>>, vector<16x8xf32>
    tpu.vector_store %arg4[%c0_17, %c0_18], %68 {strides = array<i32>} : memref<16x8xf32, #tpu.memory_space<vmem>>, vector<16x8xf32>,
    return
  }
  func.func @transform_0(%arg0: i32) -> i32 {
    %c0_i32 = arith.constant 0 : i32
    %c0_i32_0 = arith.constant 0 : i32
    return %c0_i32 : i32
  }
  func.func @transform_1(%arg0: i32) -> i32 {
    %c0_i32 = arith.constant 0 : i32
    %c0_i32_0 = arith.constant 0 : i32
    return %c0_i32 : i32
  }
  func.func @transform_2(%arg0: i32) -> (i32, i32) {
    %c0_i32 = arith.constant 0 : i32
    %c0_i32_0 = arith.constant 0 : i32
    return %arg0, %c0_i32 : i32, i32
  }
  func.func @transform_3(%arg0: i32) -> (i32, i32) {
    %c0_i32 = arith.constant 0 : i32
    %c0_i32_0 = arith.constant 0 : i32
    return %arg0, %c0_i32 : i32, i32
  }
}

</mosaic_0001>

<llo_original>
// kernel: tpu_custom_call.1
$region0: #{tpu_custom_call.1}
  #allocation0 [shape = 'u32[]', space=smem, size = 0x4, offset = 0x4, fixed_abs, tag = 'smem constant byte address 0x4 - core index']
  #allocation1 [shape = 'u32[72,128]{1,0:T(1,128)}', space=vmem, size = 0x9000, scoped, tag = 'internal scratch']
  #allocation2 [shape = 'f32[1]{0:T(128)S(6)}', space=smem, size = 0x200, scoped, tag = 'scoped memory for tpu_custom_call.1']
  #allocation3 [shape = 'f32[1]{0:T(128)S(6)}', space=smem, size = 0x200, scoped, tag = 'scoped memory for tpu_custom_call.1']
  %s0 = inlined_call_operand.<no memory space> [shape: f32[1], index: 0, kind: input, shape index: {}]
  %s1 = inlined_call_operand.<no memory space> [shape: f32[1], index: 1, kind: input, shape index: {}]
  %s2 = inlined_call_operand.vmem [shape: f32[16,8], index: 2, kind: input, shape index: {}]
  %s3 = inlined_call_operand.vmem [shape: f32[16,8], index: 3, kind: output, shape index: {}]
  %s4 = sld [smem:[#allocation0]]
  $region22: #{tpu_custom_call.1} parent=0
    _
  %s6 = ssub.s32 1, %s4
  %s7 = scalar_select 0, %s6, %s4
  %8 = sst [smem:[#allocation2]] %s0
  %9 = sst [smem:[#allocation3]] %s1
  // Predicated region
  $region2: #{tpu_custom_call.1} parent=0 // pred_check
    _
  $region3: #{tpu_custom_call.1} parent=0 // pred_check_branch
    %11 = sbr.rel (0) target = $region5
  $region4: #{tpu_custom_call.1} parent=0 // pred_region
    _
  $region5: #{tpu_custom_call.1} parent=0 // pred_fallthru
    _
  // Predicated region
  $region6: #{tpu_custom_call.1} parent=0 // pred_check
    _
  $region7: #{tpu_custom_call.1} parent=0 // pred_check_branch
    %13 = sbr.rel (0) target = $region9
  $region8: #{tpu_custom_call.1} parent=0 // pred_region
    _
  $region9: #{tpu_custom_call.1} parent=0 // pred_fallthru
    _
  // Predicated region
  $region10: #{tpu_custom_call.1} parent=0 // pred_check
    _
  $region11: #{tpu_custom_call.1} parent=0 // pred_check_branch
    %15 = sbr.rel (0) target = $region13
  $region12: #{tpu_custom_call.1} parent=0 // pred_region
    _
  $region13: #{tpu_custom_call.1} parent=0 // pred_fallthru
    _
  %v16 = vld [vmem:[%s2] sm:$0xff]
  %v17 = vld [vmem:[%s2 + $0x8] sm:$0xff]
  %v18 = vlaneseq
  %v19 = vand.u32 %v18, 127
  %vm20 = vcmp.eq.s32.totalorder %v19, 0
  %s21 = sld [smem:[#allocation2]]
  %s22 = sld [smem:[#allocation3]]
  %v23 = vstv %s21
  %v24 = vrcp.pop %v23
  %v25 = vmul.f32 %v23, %v24
  %v26 = vsub.f32 1.0, %v25
  %v27 = vmul.f32 %v24, %v26
  %v28 = vadd.f32 %v24, %v27
  %vm29 = vweird.f32 %v23
  %vm30 = vweird.f32 %v24
  %vm31 = vmor %vm29, %vm30
  %v32 = vsel %vm31, %v24, %v28
  %v33 = vand.u32 2147483647, %v23
  %vm34 = vcmp.eq.f32.partialorder %v33, 8.507059e+37
  %v35 = vand.u32 %v23, 2147483648
  %v36 = vor.u32 1.1754944e-38, %v35
  %v37 = vsel %vm34, %v36, %v32
  %s38 = vtos %v37
  %v39 = vstv %s38
  %v40 = vrsqrt.pop %v39
  %v41 = vmul.f32 %v40, %v39
  %v42 = vmul.f32 %v41, %v40
  %v43 = vmul.f32 0.5, %v42
  %v44 = vsub.f32 1.5, %v43
  %v45 = vmul.f32 %v40, %v44
  %v46 = vmul.f32 %v39, %v45
  %vm47 = vcmp.eq.f32.partialorder %v39, inf
  %v48 = vsel %vm47, %v39, %v46
  %vm49 = vcmp.eq.f32.partialorder %v39, 0.0
  %v50 = vand.u32 %v39, 2147483648
  %v51 = vsel %vm49, %v50, %v48
  %s52 = vtos %v51
  %v53 = vstv %s52
  %v54 = vrcp.pop %v53
  %v55 = vmul.f32 %v53, %v54
  %v56 = vsub.f32 1.0, %v55
  %v57 = vmul.f32 %v54, %v56
  %v58 = vadd.f32 %v54, %v57
  %vm59 = vweird.f32 %v53
  %vm60 = vweird.f32 %v54
  %vm61 = vmor %vm59, %vm60
  %v62 = vsel %vm61, %v54, %v58
  %v63 = vand.u32 2147483647, %v53
  %vm64 = vcmp.eq.f32.partialorder %v63, 8.507059e+37
  %v65 = vand.u32 %v53, 2147483648
  %v66 = vor.u32 1.1754944e-38, %v65
  %v67 = vsel %vm64, %v66, %v62
  %s68 = vtos %v67
  %v69 = vstv %s22
  %v70 = vrcp.pop %v69
  %v71 = vmul.f32 %v69, %v70
  %v72 = vsub.f32 1.0, %v71
  %v73 = vmul.f32 %v70, %v72
  %v74 = vadd.f32 %v70, %v73
  %vm75 = vweird.f32 %v69
  %vm76 = vweird.f32 %v70
  %vm77 = vmor %vm75, %vm76
  %v78 = vsel %vm77, %v70, %v74
  %v79 = vand.u32 2147483647, %v69
  %vm80 = vcmp.eq.f32.partialorder %v79, 8.507059e+37
  %v81 = vand.u32 %v69, 2147483648
  %v82 = vor.u32 1.1754944e-38, %v81
  %v83 = vsel %vm80, %v82, %v78
  %s84 = vtos %v83
  %v85 = vstv %s84
  %v86 = vrsqrt.pop %v85
  %v87 = vmul.f32 %v86, %v85
  %v88 = vmul.f32 %v87, %v86
  %v89 = vmul.f32 0.5, %v88
  %v90 = vsub.f32 1.5, %v89
  %v91 = vmul.f32 %v86, %v90
  %v92 = vmul.f32 %v85, %v91
  %vm93 = vcmp.eq.f32.partialorder %v85, inf
  %v94 = vsel %vm93, %v85, %v92
  %vm95 = vcmp.eq.f32.partialorder %v85, 0.0
  %v96 = vand.u32 %v85, 2147483648
  %v97 = vsel %vm95, %v96, %v94
  %s98 = vtos %v97
  %v99 = vstv %s98
  %v100 = vrcp.pop %v99
  %v101 = vmul.f32 %v99, %v100
  %v102 = vsub.f32 1.0, %v101
  %v103 = vmul.f32 %v100, %v102
  %v104 = vadd.f32 %v100, %v103
  %vm105 = vweird.f32 %v99
  %vm106 = vweird.f32 %v100
  %vm107 = vmor %vm105, %vm106
  %v108 = vsel %vm107, %v100, %v104
  %v109 = vand.u32 2147483647, %v99
  %vm110 = vcmp.eq.f32.partialorder %v109, 8.507059e+37
  %v111 = vand.u32 %v99, 2147483648
  %v112 = vor.u32 1.1754944e-38, %v111
  %v113 = vsel %vm110, %v112, %v108
  %s114 = vtos %v113
  %v115 = vsel %vm20, 0.0, %v16
  %v116 = vsel %vm20, 0.0, %v17
  %v117 = vmul.f32 %v115, %v115
  %v118 = vmul.f32 %v116, %v116
  %vm119 = vcmask 64512
  %v120 = vsel %vm119, %v117, 0.0
  %121 = vadd.xlane.f32.xlu0 %v120
  %v122 = vpop.xlane.xlu0 %121
  %v123 = vsel %vm119, %v118, 0.0
  %124 = vadd.xlane.f32.xlu0 %v123
  %v125 = vpop.xlane.xlu0 %124
  %v126 = vrsqrt.pop %v122
  %v127 = vmul.f32 %v126, %v122
  %v128 = vmul.f32 %v127, %v126
  %v129 = vmul.f32 0.5, %v128
  %v130 = vsub.f32 1.5, %v129
  %v131 = vmul.f32 %v126, %v130
  %v132 = vmul.f32 %v122, %v131
  %vm133 = vcmp.eq.f32.partialorder %v122, inf
  %v134 = vsel %vm133, %v122, %v132
  %vm135 = vcmp.eq.f32.partialorder %v122, 0.0
  %v136 = vand.u32 %v122, 2147483648
  %v137 = vsel %vm135, %v136, %v134
  %v138 = vrsqrt.pop %v125
  %v139 = vmul.f32 %v138, %v125
  %v140 = vmul.f32 %v139, %v138
  %v141 = vmul.f32 0.5, %v140
  %v142 = vsub.f32 1.5, %v141
  %v143 = vmul.f32 %v138, %v142
  %v144 = vmul.f32 %v125, %v143
  %vm145 = vcmp.eq.f32.partialorder %v125, inf
  %v146 = vsel %vm145, %v125, %v144
  %vm147 = vcmp.eq.f32.partialorder %v125, 0.0
  %v148 = vand.u32 %v125, 2147483648
  %v149 = vsel %vm147, %v148, %v146
  %v150 = vmax.f32 %v137, 1e-15
  %v151 = vmax.f32 %v149, 1e-15
  %v152 = vstv %s68
  %v153 = vmul.f32 %v16, %v152
  %v154 = vmul.f32 %v17, %v152
  %v155 = vmax.f32 %v153, 1.0000001
  %v156 = vmax.f32 %v154, 1.0000001
  %v157 = vmul.f32 %v155, %v155
  %v158 = vmul.f32 %v156, %v156
  %v159 = vsub.f32 %v157, 1.0
  %v160 = vsub.f32 %v158, 1.0
  %v161 = vrsqrt.pop %v159
  %v162 = vmul.f32 %v161, %v159
  %v163 = vmul.f32 %v162, %v161
  %v164 = vmul.f32 0.5, %v163
  %v165 = vsub.f32 1.5, %v164
  %v166 = vmul.f32 %v161, %v165
  %v167 = vmul.f32 %v159, %v166
  %vm168 = vcmp.eq.f32.partialorder %v159, inf
  %v169 = vsel %vm168, %v159, %v167
  %vm170 = vcmp.eq.f32.partialorder %v159, 0.0
  %v171 = vand.u32 %v159, 2147483648
  %v172 = vsel %vm170, %v171, %v169
  %v173 = vrsqrt.pop %v160
  %v174 = vmul.f32 %v173, %v160
  %v175 = vmul.f32 %v174, %v173
  %v176 = vmul.f32 0.5, %v175
  %v177 = vsub.f32 1.5, %v176
  %v178 = vmul.f32 %v173, %v177
  %v179 = vmul.f32 %v160, %v178
  %vm180 = vcmp.eq.f32.partialorder %v160, inf
  %v181 = vsel %vm180, %v160, %v179
  %vm182 = vcmp.eq.f32.partialorder %v160, 0.0
  %v183 = vand.u32 %v160, 2147483648
  %v184 = vsel %vm182, %v183, %v181
  %v185 = vadd.f32 %v155, %v172
  %v186 = vadd.f32 %v156, %v184
  %v187 = vlog2.pop %v185
  %v188 = vmul.f32 %v187, 0.6931472
  %v189 = vlog2.pop %v186
  %v190 = vmul.f32 %v189, 0.6931472
  %v191 = vstv %s52
  %v192 = vmul.f32 %v191, %v188
  %v193 = vmul.f32 %v191, %v190
  %v194 = vrcp.pop %v150
  %v195 = vmul.f32 %v150, %v194
  %v196 = vsub.f32 1.0, %v195
  %v197 = vmul.f32 %v194, %v196
  %v198 = vadd.f32 %v194, %v197
  %vm199 = vweird.f32 %v150
  %vm200 = vweird.f32 %v194
  %vm201 = vmor %vm199, %vm200
  %v202 = vsel %vm201, %v194, %v198
  %v203 = vand.u32 2147483647, %v150
  %vm204 = vcmp.eq.f32.partialorder %v203, 8.507059e+37
  %v205 = vand.u32 %v150, 2147483648
  %v206 = vor.u32 1.1754944e-38, %v205
  %v207 = vsel %vm204, %v206, %v202
  %v208 = vrcp.pop %v151
  %v209 = vmul.f32 %v151, %v208
  %v210 = vsub.f32 1.0, %v209
  %v211 = vmul.f32 %v208, %v210
  %v212 = vadd.f32 %v208, %v211
  %vm213 = vweird.f32 %v151
  %vm214 = vweird.f32 %v208
  %vm215 = vmor %vm213, %vm214
  %v216 = vsel %vm215, %v208, %v212
  %v217 = vand.u32 2147483647, %v151
  %vm218 = vcmp.eq.f32.partialorder %v217, 8.507059e+37
  %v219 = vand.u32 %v151, 2147483648
  %v220 = vor.u32 1.1754944e-38, %v219
  %v221 = vsel %vm218, %v220, %v216
  %v222 = vmul.f32 %v192, %v207
  %v223 = vmul.f32 %v193, %v221
  %225 = vset.pattern.permute.xlu0 0
  %226 = vperm.xlu0 %225, %v222
  %v227 = vpop.permute.xlu0 %226
  %230 = vset.pattern.permute.xlu0 0
  %231 = vperm.xlu0 %230, %v223
  %v232 = vpop.permute.xlu0 %231
  %v234 = vmul.f32 %v115, %v227
  %v235 = vmul.f32 %v116, %v232
  %v236 = vmax.f32 %v234, 0.0
  %v237 = vmax.f32 %v235, 0.0
  %v238 = vmul.f32 %v236, %v236
  %v239 = vmul.f32 %v237, %v237
  %v240 = vsel %vm119, %v238, 0.0
  %241 = vadd.xlane.f32.xlu0 %v240
  %v242 = vpop.xlane.xlu0 %241
  %v243 = vsel %vm119, %v239, 0.0
  %244 = vadd.xlane.f32.xlu0 %v243
  %v245 = vpop.xlane.xlu0 %244
  %v246 = vrsqrt.pop %v242
  %v247 = vmul.f32 %v246, %v242
  %v248 = vmul.f32 %v247, %v246
  %v249 = vmul.f32 0.5, %v248
  %v250 = vsub.f32 1.5, %v249
  %v251 = vmul.f32 %v246, %v250
  %v252 = vmul.f32 %v242, %v251
  %vm253 = vcmp.eq.f32.partialorder %v242, inf
  %v254 = vsel %vm253, %v242, %v252
  %vm255 = vcmp.eq.f32.partialorder %v242, 0.0
  %v256 = vand.u32 %v242, 2147483648
  %v257 = vsel %vm255, %v256, %v254
  %v258 = vrsqrt.pop %v245
  %v259 = vmul.f32 %v258, %v245
  %v260 = vmul.f32 %v259, %v258
  %v261 = vmul.f32 0.5, %v260
  %v262 = vsub.f32 1.5, %v261
  %v263 = vmul.f32 %v258, %v262
  %v264 = vmul.f32 %v245, %v263
  %vm265 = vcmp.eq.f32.partialorder %v245, inf
  %v266 = vsel %vm265, %v245, %v264
  %vm267 = vcmp.eq.f32.partialorder %v245, 0.0
  %v268 = vand.u32 %v245, 2147483648
  %v269 = vsel %vm267, %v268, %v266
  %v270 = vmax.f32 %v257, 1e-15
  %v271 = vmax.f32 %v269, 1e-15
  %v272 = vstv %s114
  %v273 = vmul.f32 %v270, %v272
  %v274 = vmul.f32 %v271, %v272
  %v275 = vmul.f32 %v273, 1.442695
  %v276 = vpow.pop %v275
  %v277 = vmul.f32 %v274, 1.442695
  %v278 = vpow.pop %v277
  %v279 = vrcp.pop %v276
  %v280 = vmul.f32 %v276, %v279
  %v281 = vsub.f32 1.0, %v280
  %v282 = vmul.f32 %v279, %v281
  %v283 = vadd.f32 %v279, %v282
  %vm284 = vweird.f32 %v276
  %vm285 = vweird.f32 %v279
  %vm286 = vmor %vm284, %vm285
  %v287 = vsel %vm286, %v279, %v283
  %v288 = vand.u32 2147483647, %v276
  %vm289 = vcmp.eq.f32.partialorder %v288, 8.507059e+37
  %v290 = vand.u32 %v276, 2147483648
  %v291 = vor.u32 1.1754944e-38, %v290
  %v292 = vsel %vm289, %v291, %v287
  %v293 = vrcp.pop %v278
  %v294 = vmul.f32 %v278, %v293
  %v295 = vsub.f32 1.0, %v294
  %v296 = vmul.f32 %v293, %v295
  %v297 = vadd.f32 %v293, %v296
  %vm298 = vweird.f32 %v278
  %vm299 = vweird.f32 %v293
  %vm300 = vmor %vm298, %vm299
  %v301 = vsel %vm300, %v293, %v297
  %v302 = vand.u32 2147483647, %v278
  %vm303 = vcmp.eq.f32.partialorder %v302, 8.507059e+37
  %v304 = vand.u32 %v278, 2147483648
  %v305 = vor.u32 1.1754944e-38, %v304
  %v306 = vsel %vm303, %v305, %v301
  %v307 = vsub.f32 %v276, %v292
  %v308 = vsub.f32 %v278, %v306
  %v309 = vmul.f32 %v307, 0.5
  %v310 = vmul.f32 %v308, 0.5
  %v311 = vstv %s98
  %v312 = vmul.f32 %v311, %v309
  %v313 = vmul.f32 %v311, %v310
  %v314 = vrcp.pop %v270
  %v315 = vmul.f32 %v270, %v314
  %v316 = vsub.f32 1.0, %v315
  %v317 = vmul.f32 %v314, %v316
  %v318 = vadd.f32 %v314, %v317
  %vm319 = vweird.f32 %v270
  %vm320 = vweird.f32 %v314
  %vm321 = vmor %vm319, %vm320
  %v322 = vsel %vm321, %v314, %v318
  %v323 = vand.u32 2147483647, %v270
  %vm324 = vcmp.eq.f32.partialorder %v323, 8.507059e+37
  %v325 = vand.u32 %v270, 2147483648
  %v326 = vor.u32 1.1754944e-38, %v325
  %v327 = vsel %vm324, %v326, %v322
  %v328 = vrcp.pop %v271
  %v329 = vmul.f32 %v271, %v328
  %v330 = vsub.f32 1.0, %v329
  %v331 = vmul.f32 %v328, %v330
  %v332 = vadd.f32 %v328, %v331
  %vm333 = vweird.f32 %v271
  %vm334 = vweird.f32 %v328
  %vm335 = vmor %vm333, %vm334
  %v336 = vsel %vm335, %v328, %v332
  %v337 = vand.u32 2147483647, %v271
  %vm338 = vcmp.eq.f32.partialorder %v337, 8.507059e+37
  %v339 = vand.u32 %v271, 2147483648
  %v340 = vor.u32 1.1754944e-38, %v339
  %v341 = vsel %vm338, %v340, %v336
  %v342 = vmul.f32 %v312, %v327
  %v343 = vmul.f32 %v313, %v341
  %v344 = vmul.f32 %v236, %v342
  %v345 = vmul.f32 %v237, %v343
  %v346 = vmul.f32 %v344, %v344
  %v347 = vmul.f32 %v345, %v345
  %v348 = vsel %vm119, %v346, 0.0
  %349 = vadd.xlane.f32.xlu0 %v348
  %v350 = vpop.xlane.xlu0 %349
  %v351 = vsel %vm119, %v347, 0.0
  %352 = vadd.xlane.f32.xlu0 %v351
  %v353 = vpop.xlane.xlu0 %352
  %v354 = vstv %s84
  %v355 = vadd.f32 %v354, %v350
  %v356 = vadd.f32 %v354, %v353
  %v357 = vmax.f32 %v355, 1e-07
  %v358 = vmax.f32 %v356, 1e-07
  %v359 = vrsqrt.pop %v357
  %v360 = vmul.f32 %v359, %v357
  %v361 = vmul.f32 %v360, %v359
  %v362 = vmul.f32 0.5, %v361
  %v363 = vsub.f32 1.5, %v362
  %v364 = vmul.f32 %v359, %v363
  %v365 = vmul.f32 %v357, %v364
  %vm366 = vcmp.eq.f32.partialorder %v357, inf
  %v367 = vsel %vm366, %v357, %v365
  %vm368 = vcmp.eq.f32.partialorder %v357, 0.0
  %v369 = vand.u32 %v357, 2147483648
  %v370 = vsel %vm368, %v369, %v367
  %v371 = vrsqrt.pop %v358
  %v372 = vmul.f32 %v371, %v358
  %v373 = vmul.f32 %v372, %v371
  %v374 = vmul.f32 0.5, %v373
  %v375 = vsub.f32 1.5, %v374
  %v376 = vmul.f32 %v371, %v375
  %v377 = vmul.f32 %v358, %v376
  %vm378 = vcmp.eq.f32.partialorder %v358, inf
  %v379 = vsel %vm378, %v358, %v377
  %vm380 = vcmp.eq.f32.partialorder %v358, 0.0
  %v381 = vand.u32 %v358, 2147483648
  %v382 = vsel %vm380, %v381, %v379
  %v383 = vsel %vm20, %v370, %v344
  %v384 = vsel %vm20, %v382, %v345
  %385 = vst.msk [vmem:[%s3] sm:$0xff] %vm119, %v383
  %386 = vst.msk [vmem:[%s3 + $0x8] sm:$0xff] %vm119, %v384
  // Predicated region
  $region14: #{tpu_custom_call.1} parent=0 // pred_check
    _
  $region15: #{tpu_custom_call.1} parent=0 // pred_check_branch
    %388 = sbr.rel (0) target = $region17
  $region16: #{tpu_custom_call.1} parent=0 // pred_region
    _
  $region17: #{tpu_custom_call.1} parent=0 // pred_fallthru
    _
  // Predicated region
  $region18: #{tpu_custom_call.1} parent=0 // pred_check
    _
  $region19: #{tpu_custom_call.1} parent=0 // pred_check_branch
    %390 = sbr.rel (0) target = $region21
  $region20: #{tpu_custom_call.1} parent=0 // pred_region
    _
  $region21: #{tpu_custom_call.1} parent=0 // pred_fallthru
    _

</llo_original>
